<compile_context>
chip_gen: v5e
topology: v5e:2x2
jax: 0.10.0
libtpu: 0.0.40
codegen_flags: <defaults>
</compile_context>

<pallas_src>
import functools

import jax
import jax.numpy as jnp
from jax import lax
from jax.experimental import pallas as pl
from jax.experimental.pallas import tpu as pltpu

# ---- static configuration (small, consistent with the module's forward) ----
B, C, H, W = 2, 3, 16, 16                  # batch, RGB channels, spatial
MARGIN = 2                                 # analogue of margin=10 on 224x224
HC, WC = H - 2 * MARGIN, W - 2 * MARGIN    # 12, 12
EMB_DIM = 32                               # synthetic identity-embedding dim
F_DIM = C * H * W                          # 768 = 6*128 (lane-aligned K)
FC_DIM = HC * WC * C                       # 432 (cropped NHWC flatten)

# VGGFace2 per-channel BGR mean (from VGGFace2Loss)
MEAN_BGR = jnp.array([91.4953, 103.8827, 131.0912], dtype=jnp.float32)


# --------------------------- fused Pallas kernel -----------------------------
def _fused_face_loss_kernel(x1_ref, x2_ref, w_ref, b_ref, out_ref):
    """Both embeddings + cosine-similarity loss in one body.

    x1_ref/x2_ref: [B, F_DIM] full NCHW-RGB flattened images (input / output).
    w_ref:         [F_DIM, D] effective weight with BGR flip, *255-mean, crop
                   (zero rows), *2-1 and bilinear resize all folded in.
    b_ref:         [1, D] folded preprocessing bias.
    out_ref:       [1, 1] scalar loss.
    """
    w = w_ref[...]
    b = b_ref[...]
    e1 = jnp.dot(x1_ref[...], w, preferred_element_type=jnp.float32) + b  # [B, D]
    e2 = jnp.dot(x2_ref[...], w, preferred_element_type=jnp.float32) + b  # [B, D]

    w12 = jnp.sum(e1 * e2, axis=-1, keepdims=True)   # [B, 1]  (XLU lane reduce)
    w11 = jnp.sum(e1 * e1, axis=-1, keepdims=True)
    w22 = jnp.sum(e2 * e2, axis=-1, keepdims=True)
    eps = jnp.float32(1e-8)
    # cos = w12 / max(||e1||*||e2||, eps), via rsqrt on the EUP slot.
    cos = w12 * lax.rsqrt(jnp.maximum(w11 * w22, eps * eps))
    out_ref[...] = jnp.mean(1.0 - cos, keepdims=True)                     # [1, 1]


_VMEM = pl.BlockSpec(memory_space=pltpu.MemorySpace.VMEM)


def _fused_loss(x1, x2, w_eff, bias):
    out = pl.pallas_call(
        _fused_face_loss_kernel,
        out_shape=jax.ShapeDtypeStruct((1, 1), jnp.float32),
        in_specs=[_VMEM, _VMEM, _VMEM, _VMEM],
        out_specs=_VMEM,
    )(x1, x2, w_eff, bias)
    return out[0, 0]


# --------------------------- one-time weight folding -------------------------
def build_effective_weights(weight):
    """Fold ALL preprocessing into one [F_DIM, EMB_DIM] weight + [1, D] bias.

    `weight` is the synthetic identity-net weight [F_DIM, EMB_DIM], indexed by
    the NHWC flatten of the resized BGR image. Valid because crop / bilinear
    resize (align_corners=False, weights sum to 1) / channel flip are linear
    and the pixel preprocessing is affine.

    Op order folded (matches VGGFace2Loss: transform -> crop -> *2-1 ->
    resize -> net):  z = (255*x_bgr - mean_bgr)*2 - 1 = 510*x_bgr - (2*mean+1),
    then bilinear resize, then the linear embedding.
    """
    hi = lax.Precision.HIGHEST

    # Adjoint of the bilinear resize: row i = resize(basis_i) flattened (H,W,C).
    # jax.image.resize 'bilinear' uses half-pixel centers and (for an upsample
    # like 12->16) no antialias, matching torch F.interpolate(align_corners=False).
    eye = jnp.eye(FC_DIM, dtype=jnp.float32).reshape(FC_DIM, HC, WC, C)
    r_t = jax.image.resize(eye, (FC_DIM, H, W, C), method="bilinear")
    r_t = r_t.reshape(FC_DIM, F_DIM)                                  # [432, 768]

    w_crop = jnp.dot(r_t, 510.0 * weight, precision=hi)               # [432, 32], rows (h,w,c_bgr)
    mean_flat = jnp.tile(MEAN_BGR, H * W)                             # [768], NHWC-BGR order
    bias = jnp.dot(-(2.0 * mean_flat + 1.0), weight, precision=hi)    # [32]

    # Re-index rows: cropped NHWC-BGR -> cropped NCHW-RGB.
    w4 = w_crop.reshape(HC, WC, C, EMB_DIM)[:, :, ::-1, :]            # index by c_rgb
    w_nchw = jnp.transpose(w4, (2, 0, 1, 3))                          # [C, HC, WC, D]

    # Fold the margin crop: embed into the full [C, H, W] grid (zero rows for
    # cropped-out pixels) so the kernel takes the plain 768-flatten.
    w_full = jnp.zeros((C, H, W, EMB_DIM), jnp.float32)
    w_full = w_full.at[:, MARGIN:H - MARGIN, MARGIN:W - MARGIN, :].set(w_nchw)
    w_full = w_full.reshape(F_DIM, EMB_DIM)                           # [768, 32]
    return w_full, bias.reshape(1, EMB_DIM)


# ------------------------------ forward wrapper -------------------------------
@functools.partial(jax.jit, static_argnames=("metric",))
def face_recognition_loss(inp, out, w_eff, bias, metric="cosine_similarity"):
    """FaceRecognitionLoss.forward(input, output) with network='vggface2'."""
    if metric != "cosine_similarity":
        # TODO(synk): 'l1' / 'l2' metric variants of VGGFace2Loss not implemented.
        raise NotImplementedError(f"metric '{metric}' not implemented")
    # Crop/flip/normalize/resize are folded into w_eff, so the wrapper is
    # reshape-only (free bitcast of the contiguous NCHW layout under jit).
    x1 = inp.reshape(inp.shape[0], F_DIM).astype(jnp.float32)
    x2 = out.reshape(out.shape[0], F_DIM).astype(jnp.float32)
    return _fused_loss(x1, x2, w_eff, bias)


# -------------------------------- main ----------------------------------------
if __name__ == "__main__":
    key = jax.random.PRNGKey(0)
    k1, k2, k3 = jax.random.split(key, 3)

    # images in [0, 1], NCHW like the PyTorch module expects
    x = jax.random.uniform(k1, (B, C, H, W), dtype=jnp.float32)
    y = jax.random.uniform(k2, (B, C, H, W), dtype=jnp.float32)

    # TODO(synk): pretrained VGGFace2 ResNet50 replaced by a deterministic
    # synthetic linear embedding (checkpoint loading is out of scope).
    weight = (jax.random.normal(k3, (F_DIM, EMB_DIM), dtype=jnp.float32)
              / jnp.sqrt(jnp.float32(F_DIM)))

    w_eff, bias = build_effective_weights(weight)   # one-time fold, off the hot path
    loss = face_recognition_loss(x, y, w_eff, bias)
    jax.block_until_ready(loss)
    print("KERNEL_OK")
</pallas_src>

<mosaic_0001>
module attributes {stable_mosaic.version = 11 : i64} {
  func.func @_fused_face_loss_kernel(%arg0: memref<2x768xf32, #tpu.memory_space<vmem>>, %arg1: memref<2x768xf32, #tpu.memory_space<vmem>>, %arg2: memref<768x32xf32, #tpu.memory_space<vmem>>, %arg3: memref<1x32xf32, #tpu.memory_space<vmem>>, %arg4: memref<1x1xf32, #tpu.memory_space<vmem>>) attributes {dimension_semantics = [], scalar_prefetch = 0 : i64, scratch_operands = 0 : i64, tpu.core_type = #tpu.core_type<tc>} {
    %c0 = arith.constant 0 : index
    %c0_0 = arith.constant 0 : index
    %0 = vector.load %arg2[%c0, %c0_0] : memref<768x32xf32, #tpu.memory_space<vmem>>, vector<768x32xf32>
    %c0_1 = arith.constant 0 : index
    %c0_2 = arith.constant 0 : index
    %1 = vector.load %arg3[%c0_1, %c0_2] : memref<1x32xf32, #tpu.memory_space<vmem>>, vector<1x32xf32>
    %c0_3 = arith.constant 0 : index
    %c0_4 = arith.constant 0 : index
    %2 = vector.load %arg0[%c0_3, %c0_4] : memref<2x768xf32, #tpu.memory_space<vmem>>, vector<2x768xf32>
    %cst = arith.constant dense<0.000000e+00> : vector<2x32xf32>
    %3 = tpu.matmul %2, %0, %cst {dimension_numbers = #tpu.dot_dimension_numbers<[1], [0], [0], [1], [0, 0, 1, 1], [], []>} : vector<2x768xf32>, vector<768x32xf32>, vector<2x32xf32> -> vector<2x32xf32>
    %4 = vector.broadcast %1 : vector<1x32xf32> to vector<2x32xf32>
    %5 = arith.addf %3, %4 : vector<2x32xf32>
    %c0_5 = arith.constant 0 : index
    %c0_6 = arith.constant 0 : index
    %6 = vector.load %arg1[%c0_5, %c0_6] : memref<2x768xf32, #tpu.memory_space<vmem>>, vector<2x768xf32>
    %cst_7 = arith.constant dense<0.000000e+00> : vector<2x32xf32>
    %7 = tpu.matmul %6, %0, %cst_7 {dimension_numbers = #tpu.dot_dimension_numbers<[1], [0], [0], [1], [0, 0, 1, 1], [], []>} : vector<2x768xf32>, vector<768x32xf32>, vector<2x32xf32> -> vector<2x32xf32>
    %8 = vector.broadcast %1 : vector<1x32xf32> to vector<2x32xf32>
    %9 = arith.addf %7, %8 : vector<2x32xf32>
    %10 = arith.mulf %5, %9 : vector<2x32xf32>
    %cst_8 = arith.constant dense<0.000000e+00> : vector<2xf32>
    %11 = vector.multi_reduction <add>, %10, %cst_8 [1] : vector<2x32xf32> to vector<2xf32>
    %12 = vector.shape_cast %11 : vector<2xf32> to vector<2x1xf32>
    %13 = arith.mulf %5, %5 : vector<2x32xf32>
    %cst_9 = arith.constant dense<0.000000e+00> : vector<2xf32>
    %14 = vector.multi_reduction <add>, %13, %cst_9 [1] : vector<2x32xf32> to vector<2xf32>
    %15 = vector.shape_cast %14 : vector<2xf32> to vector<2x1xf32>
    %16 = arith.mulf %9, %9 : vector<2x32xf32>
    %cst_10 = arith.constant dense<0.000000e+00> : vector<2xf32>
    %17 = vector.multi_reduction <add>, %16, %cst_10 [1] : vector<2x32xf32> to vector<2xf32>
    %18 = vector.shape_cast %17 : vector<2xf32> to vector<2x1xf32>
    %19 = arith.mulf %15, %18 : vector<2x1xf32>
    %cst_11 = arith.constant 9.99999993E-9 : f32
    %cst_12 = arith.constant 9.99999993E-9 : f32
    %20 = arith.mulf %cst_11, %cst_12 : f32
    %21 = vector.broadcast %20 : f32 to vector<2x1xf32>
    %22 = arith.maximumf %19, %21 : vector<2x1xf32>
    %23 = math.rsqrt %22 : vector<2x1xf32>
    %24 = arith.mulf %12, %23 : vector<2x1xf32>
    %cst_13 = arith.constant 1.000000e+00 : f32
    %25 = vector.broadcast %cst_13 : f32 to vector<2x1xf32>
    %26 = arith.subf %25, %24 : vector<2x1xf32>
    %27 = vector.shape_cast %26 : vector<2x1xf32> to vector<1x2x1xf32>
    %cst_14 = arith.constant dense<0.000000e+00> : vector<1xf32>
    %28 = vector.multi_reduction <add>, %27, %cst_14 [1, 2] : vector<1x2x1xf32> to vector<1xf32>
    %29 = vector.shape_cast %28 : vector<1xf32> to vector<1x1x1xf32>
    %30 = vector.extract %29[0, 0, 0] : f32 from vector<1x1x1xf32>
    %31 = vector.broadcast %30 : f32 to vector<1x1xf32>
    %cst_15 = arith.constant 2.000000e+00 : f32
    %32 = vector.broadcast %cst_15 : f32 to vector<1x1xf32>
    %33 = arith.divf %31, %32 : vector<1x1xf32>
    %c0_16 = arith.constant 0 : index
    %c0_17 = arith.constant 0 : index
    %34 = vector.load %arg4[%c0_16, %c0_17] : memref<1x1xf32, #tpu.memory_space<vmem>>, vector<1x1xf32>
    tpu.vector_store %arg4[%c0_16, %c0_17], %33 {strides = array<i32>} : memref<1x1xf32, #tpu.memory_space<vmem>>, vector<1x1xf32>,
    return
  }
}

</mosaic_0001>

<llo_original>
// kernel: face_recognition_loss.1
$region0: #{face_recognition_loss.1}
  #allocation0 [shape = 'u32[]', space=smem, size = 0x4, offset = 0x4, fixed_abs, tag = 'smem constant byte address 0x4 - core index']
  #allocation1 [shape = 'u32[72,128]{1,0:T(1,128)}', space=vmem, size = 0x9000, scoped, tag = 'internal scratch']
  %s0 = inlined_call_operand.vmem [shape: f32[2,768], index: 0, kind: input, shape index: {}]
  %s1 = inlined_call_operand.vmem [shape: f32[2,768], index: 1, kind: input, shape index: {}]
  %s2 = inlined_call_operand.vmem [shape: f32[768,32], index: 2, kind: input, shape index: {}]
  %s3 = inlined_call_operand.vmem [shape: f32[1,32], index: 3, kind: input, shape index: {}]
  %s4 = inlined_call_operand.hbm [shape: f32[1,1], index: 4, kind: output, shape index: {}]
  %s5 = sld [smem:[#allocation0]]
  $region26: #{face_recognition_loss.1} parent=0
    _
  %s7 = ssub.s32 1, %s5
  %s8 = scalar_select 0, %s7, %s5
  $region1: #{face_recognition_loss.1} parent=0
    #allocation2 [shape = 'u8[512]{0}', space=vmem, size = 0x400, scoped, tag = 'output window, operand 0, single buffered']
    #allocation3 [shape = 's32[1]{0}', space=sflag, size = 0x4, scoped, tag = 'scoped memory for face_recognition_loss.1']
    %9 = vsyncpa [#allocation3], 0
    // Predicated region
    $region2: #{face_recognition_loss.1} parent=1 // pred_check
      _
    $region3: #{face_recognition_loss.1} parent=1 // pred_check_branch
      %11 = sbr.rel (0) target = $region5
    $region4: #{face_recognition_loss.1} parent=1 // pred_region
      _
    $region5: #{face_recognition_loss.1} parent=1 // pred_fallthru
      _
    // Predicated region
    $region6: #{face_recognition_loss.1} parent=1 // pred_check
      _
    $region7: #{face_recognition_loss.1} parent=1 // pred_check_branch
      %13 = sbr.rel (0) target = $region9
    $region8: #{face_recognition_loss.1} parent=1 // pred_region
      _
    $region9: #{face_recognition_loss.1} parent=1 // pred_fallthru
      _
    // Predicated region
    $region10: #{face_recognition_loss.1} parent=1 // pred_check
      _
    $region11: #{face_recognition_loss.1} parent=1 // pred_check_branch
      %15 = sbr.rel (0) target = $region13
    $region12: #{face_recognition_loss.1} parent=1 // pred_region
      _
    $region13: #{face_recognition_loss.1} parent=1 // pred_fallthru
      _
    // Predicated region
    $region14: #{face_recognition_loss.1} parent=1 // pred_check
      _
    $region15: #{face_recognition_loss.1} parent=1 // pred_check_branch
      %17 = sbr.rel (0) target = $region17
    $region16: #{face_recognition_loss.1} parent=1 // pred_region
      _
    $region17: #{face_recognition_loss.1} parent=1 // pred_fallthru
      _
    %v18 = vld [vmem:[%s2] sm:$0xff]
    %v19 = vld [vmem:[%s2 + $0x8] sm:$0xff]
    %v20 = vld [vmem:[%s2 + $0x10] sm:$0xff]
    %v21 = vld [vmem:[%s2 + $0x18] sm:$0xff]
    %v22 = vld [vmem:[%s2 + $0x20] sm:$0xff]
    %v23 = vld [vmem:[%s2 + $0x28] sm:$0xff]
    %v24 = vld [vmem:[%s2 + $0x30] sm:$0xff]
    %v25 = vld [vmem:[%s2 + $0x38] sm:$0xff]
    %v26 = vld [vmem:[%s2 + $0x40] sm:$0xff]
    %v27 = vld [vmem:[%s2 + $0x48] sm:$0xff]
    %v28 = vld [vmem:[%s2 + $0x50] sm:$0xff]
    %v29 = vld [vmem:[%s2 + $0x58] sm:$0xff]
    %v30 = vld [vmem:[%s2 + $0x60] sm:$0xff]
    %v31 = vld [vmem:[%s2 + $0x68] sm:$0xff]
    %v32 = vld [vmem:[%s2 + $0x70] sm:$0xff]
    %v33 = vld [vmem:[%s2 + $0x78] sm:$0xff]
    %v34 = vld [vmem:[%s2 + $0x80] sm:$0xff]
    %v35 = vld [vmem:[%s2 + $0x88] sm:$0xff]
    %v36 = vld [vmem:[%s2 + $0x90] sm:$0xff]
    %v37 = vld [vmem:[%s2 + $0x98] sm:$0xff]
    %v38 = vld [vmem:[%s2 + $0xa0] sm:$0xff]
    %v39 = vld [vmem:[%s2 + $0xa8] sm:$0xff]
    %v40 = vld [vmem:[%s2 + $0xb0] sm:$0xff]
    %v41 = vld [vmem:[%s2 + $0xb8] sm:$0xff]
    %v42 = vld [vmem:[%s2 + $0xc0] sm:$0xff]
    %v43 = vld [vmem:[%s2 + $0xc8] sm:$0xff]
    %v44 = vld [vmem:[%s2 + $0xd0] sm:$0xff]
    %v45 = vld [vmem:[%s2 + $0xd8] sm:$0xff]
    %v46 = vld [vmem:[%s2 + $0xe0] sm:$0xff]
    %v47 = vld [vmem:[%s2 + $0xe8] sm:$0xff]
    %v48 = vld [vmem:[%s2 + $0xf0] sm:$0xff]
    %v49 = vld [vmem:[%s2 + $0xf8] sm:$0xff]
    %v50 = vld [vmem:[%s2 + $0x100] sm:$0xff]
    %v51 = vld [vmem:[%s2 + $0x108] sm:$0xff]
    %v52 = vld [vmem:[%s2 + $0x110] sm:$0xff]
    %v53 = vld [vmem:[%s2 + $0x118] sm:$0xff]
    %v54 = vld [vmem:[%s2 + $0x120] sm:$0xff]
    %v55 = vld [vmem:[%s2 + $0x128] sm:$0xff]
    %v56 = vld [vmem:[%s2 + $0x130] sm:$0xff]
    %v57 = vld [vmem:[%s2 + $0x138] sm:$0xff]
    %v58 = vld [vmem:[%s2 + $0x140] sm:$0xff]
    %v59 = vld [vmem:[%s2 + $0x148] sm:$0xff]
    %v60 = vld [vmem:[%s2 + $0x150] sm:$0xff]
    %v61 = vld [vmem:[%s2 + $0x158] sm:$0xff]
    %v62 = vld [vmem:[%s2 + $0x160] sm:$0xff]
    %v63 = vld [vmem:[%s2 + $0x168] sm:$0xff]
    %v64 = vld [vmem:[%s2 + $0x170] sm:$0xff]
    %v65 = vld [vmem:[%s2 + $0x178] sm:$0xff]
    %v66 = vld [vmem:[%s2 + $0x180] sm:$0xff]
    %v67 = vld [vmem:[%s2 + $0x188] sm:$0xff]
    %v68 = vld [vmem:[%s2 + $0x190] sm:$0xff]
    %v69 = vld [vmem:[%s2 + $0x198] sm:$0xff]
    %v70 = vld [vmem:[%s2 + $0x1a0] sm:$0xff]
    %v71 = vld [vmem:[%s2 + $0x1a8] sm:$0xff]
    %v72 = vld [vmem:[%s2 + $0x1b0] sm:$0xff]
    %v73 = vld [vmem:[%s2 + $0x1b8] sm:$0xff]
    %v74 = vld [vmem:[%s2 + $0x1c0] sm:$0xff]
    %v75 = vld [vmem:[%s2 + $0x1c8] sm:$0xff]
    %v76 = vld [vmem:[%s2 + $0x1d0] sm:$0xff]
    %v77 = vld [vmem:[%s2 + $0x1d8] sm:$0xff]
    %v78 = vld [vmem:[%s2 + $0x1e0] sm:$0xff]
    %v79 = vld [vmem:[%s2 + $0x1e8] sm:$0xff]
    %v80 = vld [vmem:[%s2 + $0x1f0] sm:$0xff]
    %v81 = vld [vmem:[%s2 + $0x1f8] sm:$0xff]
    %v82 = vld [vmem:[%s2 + $0x200] sm:$0xff]
    %v83 = vld [vmem:[%s2 + $0x208] sm:$0xff]
    %v84 = vld [vmem:[%s2 + $0x210] sm:$0xff]
    %v85 = vld [vmem:[%s2 + $0x218] sm:$0xff]
    %v86 = vld [vmem:[%s2 + $0x220] sm:$0xff]
    %v87 = vld [vmem:[%s2 + $0x228] sm:$0xff]
    %v88 = vld [vmem:[%s2 + $0x230] sm:$0xff]
    %v89 = vld [vmem:[%s2 + $0x238] sm:$0xff]
    %v90 = vld [vmem:[%s2 + $0x240] sm:$0xff]
    %v91 = vld [vmem:[%s2 + $0x248] sm:$0xff]
    %v92 = vld [vmem:[%s2 + $0x250] sm:$0xff]
    %v93 = vld [vmem:[%s2 + $0x258] sm:$0xff]
    %v94 = vld [vmem:[%s2 + $0x260] sm:$0xff]
    %v95 = vld [vmem:[%s2 + $0x268] sm:$0xff]
    %v96 = vld [vmem:[%s2 + $0x270] sm:$0xff]
    %v97 = vld [vmem:[%s2 + $0x278] sm:$0xff]
    %v98 = vld [vmem:[%s2 + $0x280] sm:$0xff]
    %v99 = vld [vmem:[%s2 + $0x288] sm:$0xff]
    %v100 = vld [vmem:[%s2 + $0x290] sm:$0xff]
    %v101 = vld [vmem:[%s2 + $0x298] sm:$0xff]
    %v102 = vld [vmem:[%s2 + $0x2a0] sm:$0xff]
    %v103 = vld [vmem:[%s2 + $0x2a8] sm:$0xff]
    %v104 = vld [vmem:[%s2 + $0x2b0] sm:$0xff]
    %v105 = vld [vmem:[%s2 + $0x2b8] sm:$0xff]
    %v106 = vld [vmem:[%s2 + $0x2c0] sm:$0xff]
    %v107 = vld [vmem:[%s2 + $0x2c8] sm:$0xff]
    %v108 = vld [vmem:[%s2 + $0x2d0] sm:$0xff]
    %v109 = vld [vmem:[%s2 + $0x2d8] sm:$0xff]
    %v110 = vld [vmem:[%s2 + $0x2e0] sm:$0xff]
    %v111 = vld [vmem:[%s2 + $0x2e8] sm:$0xff]
    %v112 = vld [vmem:[%s2 + $0x2f0] sm:$0xff]
    %v113 = vld [vmem:[%s2 + $0x2f8] sm:$0xff]
    %v114 = vld [vmem:[%s3] sm:$0x1]
    %v115 = vld [vmem:[%s0] sm:$0xff]
    %v116 = vld [vmem:[%s0 + $0x8] sm:$0xf]
    %v118 = vperm.slane %v114, 0
    %122 = vst [vmem:[#allocation1] ss:$4 sm:$0xff] %v115
    %s123 = scalar_lea.vmem [#allocation1], 32
    %124 = vst [vmem:[%s123] ss:$4 sm:$0xff] %v116
    %v125 = vld.sshfl [vmem:[#allocation1] sm:$0xff pattern:$0x73625140]
    %v126 = vld.sshfl [vmem:[#allocation1 + $0x8] sm:$0xff pattern:$0x73625140]
    %v127 = vld.sshfl [vmem:[#allocation1 + $0x10] sm:$0xff pattern:$0x73625140]
    %v128 = vld.sshfl [vmem:[#allocation1 + $0x18] sm:$0xff pattern:$0x73625140]
    %v129 = vld.sshfl [vmem:[#allocation1 + $0x20] sm:$0xff pattern:$0x73625140]
    %v130 = vld.sshfl [vmem:[#allocation1 + $0x28] sm:$0xff pattern:$0x73625140]
    %137 = vmatpush.msra.mxu0 %v33
    %138 = vmatpush.msra.mxu0 %v32
    %139 = vmatpush.msra.mxu0 %v31
    %140 = vmatpush.msra.mxu0 %v30
    %141 = vmatpush.msra.mxu0 %v29
    %142 = vmatpush.msra.mxu0 %v28
    %143 = vmatpush.msra.mxu0 %v27
    %144 = vmatpush.msra.mxu0 %v26
    %145 = vmatpush.msra.mxu0 %v25
    %146 = vmatpush.msra.mxu0 %v24
    %147 = vmatpush.msra.mxu0 %v23
    %148 = vmatpush.msra.mxu0 %v22
    %149 = vmatpush.msra.mxu0 %v21
    %150 = vmatpush.msra.mxu0 %v20
    %151 = vmatpush.msra.mxu0 %v19
    %152 = vmatpush.msra.mxu0 %v18
    %153 = vmatmul.f32.gmra.mxu0 %v125
    %v154 = vpop.f32.mrf.mxu0
    %v155 = vadd.f32 %v118, %v154
    %156 = vdwg.mxu0
    %157 = vmatpush.msra.mxu0 %v49
    %158 = vmatpush.msra.mxu0 %v48
    %159 = vmatpush.msra.mxu0 %v47
    %160 = vmatpush.msra.mxu0 %v46
    %161 = vmatpush.msra.mxu0 %v45
    %162 = vmatpush.msra.mxu0 %v44
    %163 = vmatpush.msra.mxu0 %v43
    %164 = vmatpush.msra.mxu0 %v42
    %165 = vmatpush.msra.mxu0 %v41
    %166 = vmatpush.msra.mxu0 %v40
    %167 = vmatpush.msra.mxu0 %v39
    %168 = vmatpush.msra.mxu0 %v38
    %169 = vmatpush.msra.mxu0 %v37
    %170 = vmatpush.msra.mxu0 %v36
    %171 = vmatpush.msra.mxu0 %v35
    %172 = vmatpush.msra.mxu0 %v34
    %173 = vmatmul.f32.gmra.mxu0 %v126
    %v174 = vpop.f32.mrf.mxu0
    %v175 = vadd.f32 %v155, %v174
    %176 = vdwg.mxu0
    %177 = vmatpush.msra.mxu0 %v65
    %178 = vmatpush.msra.mxu0 %v64
    %179 = vmatpush.msra.mxu0 %v63
    %180 = vmatpush.msra.mxu0 %v62
    %181 = vmatpush.msra.mxu0 %v61
    %182 = vmatpush.msra.mxu0 %v60
    %183 = vmatpush.msra.mxu0 %v59
    %184 = vmatpush.msra.mxu0 %v58
    %185 = vmatpush.msra.mxu0 %v57
    %186 = vmatpush.msra.mxu0 %v56
    %187 = vmatpush.msra.mxu0 %v55
    %188 = vmatpush.msra.mxu0 %v54
    %189 = vmatpush.msra.mxu0 %v53
    %190 = vmatpush.msra.mxu0 %v52
    %191 = vmatpush.msra.mxu0 %v51
    %192 = vmatpush.msra.mxu0 %v50
    %193 = vmatmul.f32.gmra.mxu0 %v127
    %v194 = vpop.f32.mrf.mxu0
    %v195 = vadd.f32 %v175, %v194
    %196 = vdwg.mxu0
    %197 = vmatpush.msra.mxu0 %v81
    %198 = vmatpush.msra.mxu0 %v80
    %199 = vmatpush.msra.mxu0 %v79
    %200 = vmatpush.msra.mxu0 %v78
    %201 = vmatpush.msra.mxu0 %v77
    %202 = vmatpush.msra.mxu0 %v76
    %203 = vmatpush.msra.mxu0 %v75
    %204 = vmatpush.msra.mxu0 %v74
    %205 = vmatpush.msra.mxu0 %v73
    %206 = vmatpush.msra.mxu0 %v72
    %207 = vmatpush.msra.mxu0 %v71
    %208 = vmatpush.msra.mxu0 %v70
    %209 = vmatpush.msra.mxu0 %v69
    %210 = vmatpush.msra.mxu0 %v68
    %211 = vmatpush.msra.mxu0 %v67
    %212 = vmatpush.msra.mxu0 %v66
    %213 = vmatmul.f32.gmra.mxu0 %v128
    %v214 = vpop.f32.mrf.mxu0
    %v215 = vadd.f32 %v195, %v214
    %216 = vdwg.mxu0
    %217 = vmatpush.msra.mxu0 %v97
    %218 = vmatpush.msra.mxu0 %v96
    %219 = vmatpush.msra.mxu0 %v95
    %220 = vmatpush.msra.mxu0 %v94
    %221 = vmatpush.msra.mxu0 %v93
    %222 = vmatpush.msra.mxu0 %v92
    %223 = vmatpush.msra.mxu0 %v91
    %224 = vmatpush.msra.mxu0 %v90
    %225 = vmatpush.msra.mxu0 %v89
    %226 = vmatpush.msra.mxu0 %v88
    %227 = vmatpush.msra.mxu0 %v87
    %228 = vmatpush.msra.mxu0 %v86
    %229 = vmatpush.msra.mxu0 %v85
    %230 = vmatpush.msra.mxu0 %v84
    %231 = vmatpush.msra.mxu0 %v83
    %232 = vmatpush.msra.mxu0 %v82
    %233 = vmatmul.f32.gmra.mxu0 %v129
    %v234 = vpop.f32.mrf.mxu0
    %v235 = vadd.f32 %v215, %v234
    %236 = vdwg.mxu0
    %237 = vmatpush.msra.mxu0 %v113
    %238 = vmatpush.msra.mxu0 %v112
    %239 = vmatpush.msra.mxu0 %v111
    %240 = vmatpush.msra.mxu0 %v110
    %241 = vmatpush.msra.mxu0 %v109
    %242 = vmatpush.msra.mxu0 %v108
    %243 = vmatpush.msra.mxu0 %v107
    %244 = vmatpush.msra.mxu0 %v106
    %245 = vmatpush.msra.mxu0 %v105
    %246 = vmatpush.msra.mxu0 %v104
    %247 = vmatpush.msra.mxu0 %v103
    %248 = vmatpush.msra.mxu0 %v102
    %249 = vmatpush.msra.mxu0 %v101
    %250 = vmatpush.msra.mxu0 %v100
    %251 = vmatpush.msra.mxu0 %v99
    %252 = vmatpush.msra.mxu0 %v98
    %253 = vmatmul.f32.gmra.mxu0 %v130
    %v254 = vpop.f32.mrf.mxu0
    %v255 = vadd.f32 %v235, %v254
    %256 = vdwg.mxu0
    %v257 = vld [vmem:[%s1] sm:$0xff]
    %v258 = vld [vmem:[%s1 + $0x8] sm:$0xf]
    %261 = vst [vmem:[#allocation1] ss:$4 sm:$0xff] %v257
    %s262 = scalar_lea.vmem [#allocation1], 32
    %263 = vst [vmem:[%s262] ss:$4 sm:$0xff] %v258
    %v264 = vld.sshfl [vmem:[#allocation1] sm:$0xff pattern:$0x73625140]
    %v265 = vld.sshfl [vmem:[#allocation1 + $0x8] sm:$0xff pattern:$0x73625140]
    %v266 = vld.sshfl [vmem:[#allocation1 + $0x10] sm:$0xff pattern:$0x73625140]
    %v267 = vld.sshfl [vmem:[#allocation1 + $0x18] sm:$0xff pattern:$0x73625140]
    %v268 = vld.sshfl [vmem:[#allocation1 + $0x20] sm:$0xff pattern:$0x73625140]
    %v269 = vld.sshfl [vmem:[#allocation1 + $0x28] sm:$0xff pattern:$0x73625140]
    %276 = vmatpush.msra.mxu0 %v33
    %277 = vmatpush.msra.mxu0 %v32
    %278 = vmatpush.msra.mxu0 %v31
    %279 = vmatpush.msra.mxu0 %v30
    %280 = vmatpush.msra.mxu0 %v29
    %281 = vmatpush.msra.mxu0 %v28
    %282 = vmatpush.msra.mxu0 %v27
    %283 = vmatpush.msra.mxu0 %v26
    %284 = vmatpush.msra.mxu0 %v25
    %285 = vmatpush.msra.mxu0 %v24
    %286 = vmatpush.msra.mxu0 %v23
    %287 = vmatpush.msra.mxu0 %v22
    %288 = vmatpush.msra.mxu0 %v21
    %289 = vmatpush.msra.mxu0 %v20
    %290 = vmatpush.msra.mxu0 %v19
    %291 = vmatpush.msra.mxu0 %v18
    %292 = vmatmul.f32.gmra.mxu0 %v264
    %v293 = vpop.f32.mrf.mxu0
    %v294 = vadd.f32 %v118, %v293
    %295 = vdwg.mxu0
    %296 = vmatpush.msra.mxu0 %v49
    %297 = vmatpush.msra.mxu0 %v48
    %298 = vmatpush.msra.mxu0 %v47
    %299 = vmatpush.msra.mxu0 %v46
    %300 = vmatpush.msra.mxu0 %v45
    %301 = vmatpush.msra.mxu0 %v44
    %302 = vmatpush.msra.mxu0 %v43
    %303 = vmatpush.msra.mxu0 %v42
    %304 = vmatpush.msra.mxu0 %v41
    %305 = vmatpush.msra.mxu0 %v40
    %306 = vmatpush.msra.mxu0 %v39
    %307 = vmatpush.msra.mxu0 %v38
    %308 = vmatpush.msra.mxu0 %v37
    %309 = vmatpush.msra.mxu0 %v36
    %310 = vmatpush.msra.mxu0 %v35
    %311 = vmatpush.msra.mxu0 %v34
    %312 = vmatmul.f32.gmra.mxu0 %v265
    %v313 = vpop.f32.mrf.mxu0
    %v314 = vadd.f32 %v294, %v313
    %315 = vdwg.mxu0
    %316 = vmatpush.msra.mxu0 %v65
    %317 = vmatpush.msra.mxu0 %v64
    %318 = vmatpush.msra.mxu0 %v63
    %319 = vmatpush.msra.mxu0 %v62
    %320 = vmatpush.msra.mxu0 %v61
    %321 = vmatpush.msra.mxu0 %v60
    %322 = vmatpush.msra.mxu0 %v59
    %323 = vmatpush.msra.mxu0 %v58
    %324 = vmatpush.msra.mxu0 %v57
    %325 = vmatpush.msra.mxu0 %v56
    %326 = vmatpush.msra.mxu0 %v55
    %327 = vmatpush.msra.mxu0 %v54
    %328 = vmatpush.msra.mxu0 %v53
    %329 = vmatpush.msra.mxu0 %v52
    %330 = vmatpush.msra.mxu0 %v51
    %331 = vmatpush.msra.mxu0 %v50
    %332 = vmatmul.f32.gmra.mxu0 %v266
    %v333 = vpop.f32.mrf.mxu0
    %v334 = vadd.f32 %v314, %v333
    %335 = vdwg.mxu0
    %336 = vmatpush.msra.mxu0 %v81
    %337 = vmatpush.msra.mxu0 %v80
    %338 = vmatpush.msra.mxu0 %v79
    %339 = vmatpush.msra.mxu0 %v78
    %340 = vmatpush.msra.mxu0 %v77
    %341 = vmatpush.msra.mxu0 %v76
    %342 = vmatpush.msra.mxu0 %v75
    %343 = vmatpush.msra.mxu0 %v74
    %344 = vmatpush.msra.mxu0 %v73
    %345 = vmatpush.msra.mxu0 %v72
    %346 = vmatpush.msra.mxu0 %v71
    %347 = vmatpush.msra.mxu0 %v70
    %348 = vmatpush.msra.mxu0 %v69
    %349 = vmatpush.msra.mxu0 %v68
    %350 = vmatpush.msra.mxu0 %v67
    %351 = vmatpush.msra.mxu0 %v66
    %352 = vmatmul.f32.gmra.mxu0 %v267
    %v353 = vpop.f32.mrf.mxu0
    %v354 = vadd.f32 %v334, %v353
    %355 = vdwg.mxu0
    %356 = vmatpush.msra.mxu0 %v97
    %357 = vmatpush.msra.mxu0 %v96
    %358 = vmatpush.msra.mxu0 %v95
    %359 = vmatpush.msra.mxu0 %v94
    %360 = vmatpush.msra.mxu0 %v93
    %361 = vmatpush.msra.mxu0 %v92
    %362 = vmatpush.msra.mxu0 %v91
    %363 = vmatpush.msra.mxu0 %v90
    %364 = vmatpush.msra.mxu0 %v89
    %365 = vmatpush.msra.mxu0 %v88
    %366 = vmatpush.msra.mxu0 %v87
    %367 = vmatpush.msra.mxu0 %v86
    %368 = vmatpush.msra.mxu0 %v85
    %369 = vmatpush.msra.mxu0 %v84
    %370 = vmatpush.msra.mxu0 %v83
    %371 = vmatpush.msra.mxu0 %v82
    %372 = vmatmul.f32.gmra.mxu0 %v268
    %v373 = vpop.f32.mrf.mxu0
    %v374 = vadd.f32 %v354, %v373
    %375 = vdwg.mxu0
    %376 = vmatpush.msra.mxu0 %v113
    %377 = vmatpush.msra.mxu0 %v112
    %378 = vmatpush.msra.mxu0 %v111
    %379 = vmatpush.msra.mxu0 %v110
    %380 = vmatpush.msra.mxu0 %v109
    %381 = vmatpush.msra.mxu0 %v108
    %382 = vmatpush.msra.mxu0 %v107
    %383 = vmatpush.msra.mxu0 %v106
    %384 = vmatpush.msra.mxu0 %v105
    %385 = vmatpush.msra.mxu0 %v104
    %386 = vmatpush.msra.mxu0 %v103
    %387 = vmatpush.msra.mxu0 %v102
    %388 = vmatpush.msra.mxu0 %v101
    %389 = vmatpush.msra.mxu0 %v100
    %390 = vmatpush.msra.mxu0 %v99
    %391 = vmatpush.msra.mxu0 %v98
    %392 = vmatmul.f32.gmra.mxu0 %v269
    %v393 = vpop.f32.mrf.mxu0
    %v394 = vadd.f32 %v374, %v393
    %395 = vdwg.mxu0
    %v396 = vmul.f32 %v255, %v394
    %vm397 = vcmask 254976
    %v398 = vsel %vm397, %v396, 0.0
    %399 = vadd.xlane.f32.xlu0 %v398
    %v400 = vpop.xlane.xlu0 %399
    %v401 = vmul.f32 %v255, %v255
    %v402 = vsel %vm397, %v401, 0.0
    %403 = vadd.xlane.f32.xlu0 %v402
    %v404 = vpop.xlane.xlu0 %403
    %v405 = vmul.f32 %v394, %v394
    %v406 = vsel %vm397, %v405, 0.0
    %407 = vadd.xlane.f32.xlu0 %v406
    %v408 = vpop.xlane.xlu0 %407
    %v409 = vmul.f32 %v404, %v408
    %v410 = vmax.f32 %v409, 1e-16
    %v411 = vrsqrt.pop %v410
    %v412 = vmul.f32 %v411, %v410
    %v413 = vmul.f32 %v412, %v411
    %v414 = vmul.f32 0.5, %v413
    %v415 = vsub.f32 1.5, %v414
    %v416 = vmul.f32 %v411, %v415
    %vm417 = vweird.f32 %v410
    %vm418 = vweird.f32 %v411
    %vm419 = vmor %vm417, %vm418
    %v420 = vsel %vm419, %v411, %v416
    %v421 = vmul.f32 %v400, %v420
    %v422 = vsub.f32 1.0, %v421
    %vm423 = vcmask 1024
    %v424 = vsel %vm423, %v422, 0.0
    %425 = vadd.xlane.f32.xlu0 %v424
    %v426 = vpop.xlane.xlu0 %425
    %v427 = vrot.slane %v426, 4
    %v428 = vadd.f32 %v426, %v427
    %v429 = vrot.slane %v428, 2
    %v430 = vadd.f32 %v428, %v429
    %v431 = vrot.slane %v430, 1
    %v432 = vadd.f32 %v430, %v431
    %s433 = vtos %v432
    %v434 = vstv %s433
    %v435 = vrcp.pop 2.0
    %v436 = vmul.f32 2.0, %v435
    %v437 = vsub.f32 1.0, %v436
    %v438 = vmul.f32 %v435, %v437
    %v439 = vadd.f32 %v435, %v438
    %vm440 = vweird.f32 %v435
    %v441 = vsel %vm440, %v435, %v439
    %v442 = vmul.f32 %v434, %v441
    %vm443 = vcmask 0
    %444 = vst.msk [vmem:[#allocation2] sm:$0x1] %vm443, %v442
    // Predicated region
    $region18: #{face_recognition_loss.1} parent=1 // pred_check
      _
    $region19: #{face_recognition_loss.1} parent=1 // pred_check_branch
      %446 = sbr.rel (0) target = $region21
    $region20: #{face_recognition_loss.1} parent=1 // pred_region
      %448 = vsyncadd [#allocation3], 0
      %s450 = sshll.u32 [#allocation2], 4
      %s451 = int_to_ptr.vmem [resolvable:$true] %s450
      %s452 = sshll.u32 %s4, 4
      %s453 = int_to_ptr.hbm [resolvable:$true] %s452
      %455 = dma.vmem_to_hbm [thread:$0]  %s451, 16, %s453, [#allocation3]
    $region21: #{face_recognition_loss.1} parent=1 // pred_fallthru
      _
    // Predicated region
    $region22: #{face_recognition_loss.1} parent=1 // pred_check
      _
    $region23: #{face_recognition_loss.1} parent=1 // pred_check_branch
      %457 = sbr.rel (0) target = $region25
    $region24: #{face_recognition_loss.1} parent=1 // pred_region
      %459 = dma.done [#allocation3], 16
    $region25: #{face_recognition_loss.1} parent=1 // pred_fallthru
      _
    %460 = vsyncpa [#allocation3], 1

</llo_original>
